<compile_context>
chip_gen: v6e
topology: v6e:2x2x1
jax: 0.10.0
libtpu: 0.0.40
codegen_flags: <defaults>
</compile_context>

<pallas_src>
import math
import jax
import jax.numpy as jnp
from jax import lax
from jax.experimental import pallas as pl
from jax.experimental.pallas import tpu as pltpu

_COS_EPS = 1e-8
_VMEM_HEADROOM = 16 * 1024 * 1024


# ---------------------------------------------------------------------------
# VMEM budget helpers
# ---------------------------------------------------------------------------
def _vmem_capacity_bytes():
    try:
        return int(pltpu.get_tpu_info().vmem_capacity_bytes)
    except Exception:
        return 64 * 1024 * 1024  # conservative default: v7x per-TensorCore VMEM


def _tile_candidates(dim):
    """Full dim first (always legal), then 256/128-aligned divisors, largest first."""
    cands = [dim]
    for t in (2048, 1024, 512, 256, 128):
        if t < dim and dim % t == 0:
            cands.append(t)
    return cands


def _choose_tiles(T, K, N, x_bytes, w_bytes, y_bytes, out_bytes, budget):
    """Pick (tk, tn): prefer full K / full N (weight fully VMEM-resident, no k loop),
    then shrink tn, then tk, until the double-buffered working set fits `budget`."""
    tp = max(8, -(-T // 8) * 8)  # sublane-padded T estimate

    def need(tk, tn):
        return (
            2 * (tp * tk * x_bytes        # x blocks (double-buffered)
                 + tk * tn * w_bytes      # weight blocks
                 + 8 * tn * 4             # bias block (sublane padded)
                 + tp * tn * y_bytes      # to_embeds blocks
                 + tp * tn * out_bytes    # output blocks
                 + 8 * tn * 4)            # cosine block (sublane padded)
            + tp * tn * 4                 # f32 accumulator scratch
        )

    best = None
    for tk in _tile_candidates(K):
        for tn in _tile_candidates(N):
            nb = need(tk, tn)
            if nb <= budget:
                return tk, tn, nb
            if best is None or nb < best[2]:
                best = (tk, tn, nb)
    return best


# ---------------------------------------------------------------------------
# Fused kernel:  out = x @ Wt + b  (bf16 MXU inputs, f32 accumulation)
#                cos[b, d] = sum_T(out*y) * rsqrt(max(sum_T(out^2)*sum_T(y^2), eps^2))
# Grid: (batch b [parallel], N-tile j [parallel], K-tile k [arbitrary/reduction]).
# ---------------------------------------------------------------------------
def _fused_linear_cosine_kernel(x_ref, wt_ref, b_ref, y_ref, out_ref, cos_ref, acc_ref):
    k = pl.program_id(2)

    @pl.when(k == 0)
    def _init():
        acc_ref[...] = jnp.zeros_like(acc_ref)

    acc_ref[...] += jnp.dot(x_ref[0], wt_ref[...], preferred_element_type=jnp.float32)

    @pl.when(k == pl.num_programs(2) - 1)
    def _epilogue():
        out = acc_ref[...] + b_ref[...]                      # (T, tn) f32 (+ (1, tn) bias)
        out_ref[0] = out.astype(out_ref.dtype)
        y = y_ref[0].astype(jnp.float32)                     # (T, tn) f32
        w12 = jnp.sum(out * y, axis=0, keepdims=True)        # (1, tn)
        w1 = jnp.sum(out * out, axis=0, keepdims=True)
        w2 = jnp.sum(y * y, axis=0, keepdims=True)
        # NOTE: clamps the product of squared norms; torch clamps each norm separately.
        # Only differs for near-zero vectors (documented).
        denom2 = jnp.maximum(w1 * w2, _COS_EPS * _COS_EPS)
        cos_ref[0] = w12 * lax.rsqrt(denom2)


def linear_cosine_pallas(x, wt, b, y, *, out_dtype=jnp.float32):
    """x: (B, T, K) bf16, wt: (K, N) bf16 (pre-transposed), b: (N,) f32, y: (B, T, N) bf16.
    Returns (out (B, T, N) out_dtype, cos (B, N) f32) where cos reduces over axis=1 (T)."""
    B, T, K = x.shape
    K2, N = wt.shape
    assert K2 == K and b.shape == (N,) and y.shape == (B, T, N)

    x_bytes = jnp.dtype(x.dtype).itemsize
    w_bytes = jnp.dtype(wt.dtype).itemsize
    y_bytes = jnp.dtype(y.dtype).itemsize
    out_bytes = jnp.dtype(out_dtype).itemsize

    budget = _vmem_capacity_bytes() - _VMEM_HEADROOM
    tk, tn, need = _choose_tiles(T, K, N, x_bytes, w_bytes, y_bytes, out_bytes, budget)
    if need > budget:
        raise ValueError(
            f"fused linear+cosine working set ({need} B) exceeds VMEM budget ({budget} B); "
            f"shapes T={T}, K={K}, N={N} need smaller tiles than available divisors allow."
        )
    assert N % tn == 0 and K % tk == 0

    vmem_limit = int(min(budget, max(32 * 1024 * 1024, need + (8 << 20))))
    b2d = b.reshape(1, N).astype(jnp.float32)
    grid = (B, N // tn, K // tk)

    cost = pl.CostEstimate(
        flops=2 * B * T * K * N + 8 * B * T * N,
        transcendentals=B * N,
        bytes_accessed=(B * T * K * x_bytes + K * N * w_bytes + N * 4
                        + B * T * N * y_bytes + B * T * N * out_bytes + B * N * 4),
    )

    out, cos3 = pl.pallas_call(
        _fused_linear_cosine_kernel,
        out_shape=(
            jax.ShapeDtypeStruct((B, T, N), out_dtype),
            jax.ShapeDtypeStruct((B, 1, N), jnp.float32),
        ),
        grid_spec=pltpu.PrefetchScalarGridSpec(
            num_scalar_prefetch=0,
            grid=grid,
            in_specs=[
                pl.BlockSpec((1, T, tk), lambda bi, j, k: (bi, 0, k)),   # x
                pl.BlockSpec((tk, tn), lambda bi, j, k: (k, j)),         # weight (constant when grid (B,1,1))
                pl.BlockSpec((1, tn), lambda bi, j, k: (0, j)),          # bias
                pl.BlockSpec((1, T, tn), lambda bi, j, k: (bi, 0, j)),   # to_embeds
            ],
            out_specs=(
                pl.BlockSpec((1, T, tn), lambda bi, j, k: (bi, 0, j)),   # linear output
                pl.BlockSpec((1, 1, tn), lambda bi, j, k: (bi, 0, j)),   # cosine(B, 1, N)
            ),
            scratch_shapes=[pltpu.VMEM((T, tn), jnp.float32)],
        ),
        compiler_params=pltpu.CompilerParams(
            dimension_semantics=("parallel", "parallel", "arbitrary"),
            vmem_limit_bytes=vmem_limit,
        ),
        cost_estimate=cost,
    )(x, wt, b2d, y)

    return out, cos3.reshape(B, N)


# ---------------------------------------------------------------------------
# LinearModel wrapper (parameters initialized deterministically in-script)
# ---------------------------------------------------------------------------
class LinearModelPallas:
    def __init__(self, key, vocab_from, vocab_to, d_from, d_to):
        k1, k2, k3, k4 = jax.random.split(key, 4)
        # Frozen word-embedding tables (stand-ins for OPT / FLAN-T5 embeddings).
        # TODO(synk): real module loads pretrained OPT / T5 embedding weights; synthetic init here.
        self.from_word_embed = 0.02 * jax.random.normal(k1, (vocab_from, d_from), jnp.float32)
        self.to_word_embed = 0.02 * jax.random.normal(k2, (vocab_to, d_to), jnp.float32)
        # bf16 gather tables: kernel inputs arrive in bf16 with no extra per-forward cast pass.
        self.from_word_embed_bf16 = self.from_word_embed.astype(jnp.bfloat16)
        self.to_word_embed_bf16 = self.to_word_embed.astype(jnp.bfloat16)
        # nn.Linear(d_from, d_to) init: U(-1/sqrt(d_from), 1/sqrt(d_from))
        bound = 1.0 / math.sqrt(d_from)
        self.W = jax.random.uniform(k3, (d_to, d_from), jnp.float32, -bound, bound)
        self.b = jax.random.uniform(k4, (d_to,), jnp.float32, -bound, bound)
        # Hoisted transpose + bf16 cast: (K, N) weight ready for the MXU, done once at init.
        self.W_T_bf16 = jnp.asarray(self.W.T, dtype=jnp.bfloat16)
        self.mode = "opt_to_t5"   # from=opt -> captions[0], to=t5 -> captions[1]

    def to_wrd_embed(self, captions):
        if self.mode == "opt_to_t5":
            from_ids, to_ids = captions[0], captions[1]
        else:
            from_ids, to_ids = captions[1], captions[0]
        from_embeds = jnp.take(self.from_word_embed_bf16, from_ids, axis=0)  # (B, T, D_from) bf16
        to_embeds = jnp.take(self.to_word_embed_bf16, to_ids, axis=0)        # (B, T, D_to) bf16
        return from_embeds, to_embeds

    def forward(self, captions, training=True):
        from_embeds, to_embeds = self.to_wrd_embed(captions)
        # Fused linear + cosine(dim=1): one HBM pass over activations instead of two.
        output, cos = linear_cosine_pallas(from_embeds, self.W_T_bf16, self.b, to_embeds)
        if training:
            loss = jnp.mean(1.0 - cos)
            return output, loss
        # Eval reuses the fused kernel; the cosine epilogue cost is negligible vs the matmul.
        return output


# ---------------------------------------------------------------------------
# Demo / smoke test
# ---------------------------------------------------------------------------
if __name__ == "__main__":
    key = jax.random.PRNGKey(0)
    B, T = 2, 8                 # batch, sequence (max_txt_len style)
    D_FROM, D_TO = 256, 128     # "opt" embed dim -> "t5" embed dim
    V_FROM, V_TO = 512, 384     # small synthetic vocab sizes

    model = LinearModelPallas(key, V_FROM, V_TO, D_FROM, D_TO)

    k_ids = jax.random.split(key, 2)
    from_ids = jax.random.randint(k_ids[0], (B, T), 0, V_FROM, dtype=jnp.int32)
    to_ids = jax.random.randint(k_ids[1], (B, T), 0, V_TO, dtype=jnp.int32)
    captions = (from_ids, to_ids)

    output, loss = model.forward(captions, training=True)
    output = jax.block_until_ready(output)
    loss = jax.block_until_ready(loss)

    # Reference check against plain JAX using the same bf16-input / f32-accumulation path.
    from_e = jnp.take(model.from_word_embed, from_ids, axis=0)      # f32
    to_e = jnp.take(model.to_word_embed, to_ids, axis=0)            # f32
    xb = from_e.astype(jnp.bfloat16).reshape(B * T, D_FROM)
    wb = model.W.T.astype(jnp.bfloat16)
    ref_out = (
        jnp.dot(xb, wb, preferred_element_type=jnp.float32) + model.b
    ).reshape(B, T, D_TO)
    yb = to_e.astype(jnp.bfloat16).astype(jnp.float32)
    w12 = jnp.sum(ref_out * yb, axis=1)
    w1 = jnp.sum(ref_out * ref_out, axis=1)
    w2 = jnp.sum(yb * yb, axis=1)
    ref_cos = w12 * lax.rsqrt(jnp.maximum(w1 * w2, _COS_EPS * _COS_EPS))
    ref_loss = jnp.mean(1.0 - ref_cos)

    # Loose sanity check vs the pure-f32 linear (bf16 input quantization only).
    ref_out_f32 = from_e @ model.W.T + model.b

    assert output.shape == (B, T, D_TO)
    assert jnp.allclose(output, ref_out, atol=1e-3, rtol=1e-3)
    assert jnp.allclose(output, ref_out_f32, atol=5e-3, rtol=5e-2)
    assert jnp.allclose(loss, ref_loss, atol=1e-4, rtol=1e-4)

    print("KERNEL_OK")
</pallas_src>

<mosaic_0001>
module attributes {stable_mosaic.version = 11 : i64} {
  func.func @_fused_linear_cosine_kernel(%arg0: i32, %arg1: i32, %arg2: i32, %arg3: memref<1x8x256xbf16, #tpu.memory_space<vmem>>, %arg4: memref<256x128xbf16, #tpu.memory_space<vmem>>, %arg5: memref<1x128xf32, #tpu.memory_space<vmem>>, %arg6: memref<1x8x128xbf16, #tpu.memory_space<vmem>>, %arg7: memref<1x8x128xf32, #tpu.memory_space<vmem>>, %arg8: memref<1x1x128xf32, #tpu.memory_space<vmem>>, %arg9: memref<8x128xf32, #tpu.memory_space<vmem>>) attributes {dimension_semantics = [#tpu.dimension_semantics<parallel>, #tpu.dimension_semantics<parallel>, #tpu.dimension_semantics<arbitrary>], iteration_bounds = array<i64: 2, 1, 1>, scalar_prefetch = 0 : i64, scratch_operands = 1 : i64, tpu.core_type = #tpu.core_type<tc>, window_params = [{transform_indices = @transform_0, window_bounds = array<i64: 1, 8, 256>}, {transform_indices = @transform_1, window_bounds = array<i64: 256, 128>}, {transform_indices = @transform_2, window_bounds = array<i64: 1, 128>}, {transform_indices = @transform_3, window_bounds = array<i64: 1, 8, 128>}, {transform_indices = @transform_4, window_bounds = array<i64: 1, 8, 128>}, {transform_indices = @transform_5, window_bounds = array<i64: 1, 1, 128>}]} {
    %c0_i32 = arith.constant 0 : i32
    %0 = arith.cmpi eq, %arg2, %c0_i32 : i32
    %1 = arith.extui %0 : i1 to i32
    %c0_i32_0 = arith.constant 0 : i32
    %2 = arith.cmpi ne, %1, %c0_i32_0 : i32
    scf.if %2 {
      %cst_11 = arith.constant 0.000000e+00 : f32
      %13 = vector.broadcast %cst_11 : f32 to vector<8x128xf32>
      %c0_12 = arith.constant 0 : index
      %c0_13 = arith.constant 0 : index
      %14 = vector.load %arg9[%c0_12, %c0_13] : memref<8x128xf32, #tpu.memory_space<vmem>>, vector<8x128xf32>
      tpu.vector_store %arg9[%c0_12, %c0_13], %13 {strides = array<i32>} : memref<8x128xf32, #tpu.memory_space<vmem>>, vector<8x128xf32>,
    } else {
    }
    %c0 = arith.constant 0 : index
    %c0_1 = arith.constant 0 : index
    %3 = vector.load %arg9[%c0, %c0_1] : memref<8x128xf32, #tpu.memory_space<vmem>>, vector<8x128xf32>
    %c0_2 = arith.constant 0 : index
    %c0_3 = arith.constant 0 : index
    %c0_4 = arith.constant 0 : index
    %4 = vector.load %arg3[%c0_2, %c0_3, %c0_4] : memref<1x8x256xbf16, #tpu.memory_space<vmem>>, vector<1x8x256xbf16>
    %5 = vector.shape_cast %4 : vector<1x8x256xbf16> to vector<8x256xbf16>
    %c0_5 = arith.constant 0 : index
    %c0_6 = arith.constant 0 : index
    %6 = vector.load %arg4[%c0_5, %c0_6] : memref<256x128xbf16, #tpu.memory_space<vmem>>, vector<256x128xbf16>
    %cst = arith.constant dense<0.000000e+00> : vector<8x128xf32>
    %7 = tpu.matmul %5, %6, %cst {dimension_numbers = #tpu.dot_dimension_numbers<[1], [0], [0], [1], [0, 0, 1, 1], [], []>} : vector<8x256xbf16>, vector<256x128xbf16>, vector<8x128xf32> -> vector<8x128xf32>
    %8 = arith.addf %3, %7 : vector<8x128xf32>
    %c0_7 = arith.constant 0 : index
    %c0_8 = arith.constant 0 : index
    %9 = vector.load %arg9[%c0_7, %c0_8] : memref<8x128xf32, #tpu.memory_space<vmem>>, vector<8x128xf32>
    tpu.vector_store %arg9[%c0_7, %c0_8], %8 {strides = array<i32>} : memref<8x128xf32, #tpu.memory_space<vmem>>, vector<8x128xf32>,
    %c0_i32_9 = arith.constant 0 : i32
    %10 = arith.cmpi eq, %arg2, %c0_i32_9 : i32
    %11 = arith.extui %10 : i1 to i32
    %c0_i32_10 = arith.constant 0 : i32
    %12 = arith.cmpi ne, %11, %c0_i32_10 : i32
    scf.if %12 {
      %c0_11 = arith.constant 0 : index
      %c0_12 = arith.constant 0 : index
      %13 = vector.load %arg9[%c0_11, %c0_12] : memref<8x128xf32, #tpu.memory_space<vmem>>, vector<8x128xf32>
      %c0_13 = arith.constant 0 : index
      %c0_14 = arith.constant 0 : index
      %14 = vector.load %arg5[%c0_13, %c0_14] : memref<1x128xf32, #tpu.memory_space<vmem>>, vector<1x128xf32>
      %15 = vector.broadcast %14 : vector<1x128xf32> to vector<8x128xf32>
      %16 = arith.addf %13, %15 : vector<8x128xf32>
      %c0_15 = arith.constant 0 : index
      %c0_16 = arith.constant 0 : index
      %c0_17 = arith.constant 0 : index
      %17 = vector.load %arg7[%c0_15, %c0_16, %c0_17] : memref<1x8x128xf32, #tpu.memory_space<vmem>>, vector<1x8x128xf32>
      %18 = vector.shape_cast %17 : vector<1x8x128xf32> to vector<8x128xf32>
      %19 = vector.shape_cast %16 : vector<8x128xf32> to vector<1x8x128xf32>
      tpu.vector_store %arg7[%c0_15, %c0_16, %c0_17], %19 {strides = array<i32>} : memref<1x8x128xf32, #tpu.memory_space<vmem>>, vector<1x8x128xf32>,
      %c0_18 = arith.constant 0 : index
      %c0_19 = arith.constant 0 : index
      %c0_20 = arith.constant 0 : index
      %20 = vector.load %arg6[%c0_18, %c0_19, %c0_20] : memref<1x8x128xbf16, #tpu.memory_space<vmem>>, vector<1x8x128xbf16>
      %21 = vector.shape_cast %20 : vector<1x8x128xbf16> to vector<8x128xbf16>
      %22 = arith.extf %21 : vector<8x128xbf16> to vector<8x128xf32>
      %23 = arith.mulf %16, %22 : vector<8x128xf32>
      %cst_21 = arith.constant dense<0.000000e+00> : vector<128xf32>
      %24 = vector.multi_reduction <add>, %23, %cst_21 [0] : vector<8x128xf32> to vector<128xf32>
      %25 = vector.shape_cast %24 : vector<128xf32> to vector<1x128xf32>
      %26 = arith.mulf %16, %16 : vector<8x128xf32>
      %cst_22 = arith.constant dense<0.000000e+00> : vector<128xf32>
      %27 = vector.multi_reduction <add>, %26, %cst_22 [0] : vector<8x128xf32> to vector<128xf32>
      %28 = vector.shape_cast %27 : vector<128xf32> to vector<1x128xf32>
      %29 = arith.mulf %22, %22 : vector<8x128xf32>
      %cst_23 = arith.constant dense<0.000000e+00> : vector<128xf32>
      %30 = vector.multi_reduction <add>, %29, %cst_23 [0] : vector<8x128xf32> to vector<128xf32>
      %31 = vector.shape_cast %30 : vector<128xf32> to vector<1x128xf32>
      %32 = arith.mulf %28, %31 : vector<1x128xf32>
      %cst_24 = arith.constant 1.000000e-16 : f32
      %33 = vector.broadcast %cst_24 : f32 to vector<1x128xf32>
      %34 = arith.maximumf %32, %33 : vector<1x128xf32>
      %35 = math.rsqrt %34 : vector<1x128xf32>
      %36 = arith.mulf %25, %35 : vector<1x128xf32>
      %c0_25 = arith.constant 0 : index
      %c0_26 = arith.constant 0 : index
      %c0_27 = arith.constant 0 : index
      %37 = vector.load %arg8[%c0_25, %c0_26, %c0_27] : memref<1x1x128xf32, #tpu.memory_space<vmem>>, vector<1x1x128xf32>
      %38 = vector.shape_cast %37 : vector<1x1x128xf32> to vector<1x128xf32>
      %39 = vector.shape_cast %36 : vector<1x128xf32> to vector<1x1x128xf32>
      tpu.vector_store %arg8[%c0_25, %c0_26, %c0_27], %39 {strides = array<i32>} : memref<1x1x128xf32, #tpu.memory_space<vmem>>, vector<1x1x128xf32>,
    } else {
    }
    return
  }
  func.func @transform_0(%arg0: i32, %arg1: i32, %arg2: i32) -> (i32, i32, i32) {
    %c0_i32 = arith.constant 0 : i32
    %c0_i32_0 = arith.constant 0 : i32
    return %arg0, %c0_i32, %arg2 : i32, i32, i32
  }
  func.func @transform_1(%arg0: i32, %arg1: i32, %arg2: i32) -> (i32, i32) {
    %c0_i32 = arith.constant 0 : i32
    return %arg2, %arg1 : i32, i32
  }
  func.func @transform_2(%arg0: i32, %arg1: i32, %arg2: i32) -> (i32, i32) {
    %c0_i32 = arith.constant 0 : i32
    %c0_i32_0 = arith.constant 0 : i32
    return %c0_i32, %arg1 : i32, i32
  }
  func.func @transform_3(%arg0: i32, %arg1: i32, %arg2: i32) -> (i32, i32, i32) {
    %c0_i32 = arith.constant 0 : i32
    %c0_i32_0 = arith.constant 0 : i32
    return %arg0, %c0_i32, %arg1 : i32, i32, i32
  }
  func.func @transform_4(%arg0: i32, %arg1: i32, %arg2: i32) -> (i32, i32, i32) {
    %c0_i32 = arith.constant 0 : i32
    %c0_i32_0 = arith.constant 0 : i32
    return %arg0, %c0_i32, %arg1 : i32, i32, i32
  }
  func.func @transform_5(%arg0: i32, %arg1: i32, %arg2: i32) -> (i32, i32, i32) {
    %c0_i32 = arith.constant 0 : i32
    %c0_i32_0 = arith.constant 0 : i32
    return %arg0, %c0_i32, %arg1 : i32, i32, i32
  }
}

</mosaic_0001>

<llo_original>
// kernel: tpu_custom_call.1
$region0: #{tpu_custom_call.1}
  #allocation0 [shape = 'u32[]', space=smem, size = 0x4, offset = 0x4, fixed_abs, tag = 'smem constant byte address 0x4 - core index']
  #allocation1 [shape = 'u32[144,128]{1,0:T(1,128)}', space=vmem, size = 0x12000, scoped, tag = 'internal scratch']
  #allocation2 [shape = 'f32[8,128]{1,0:T(8,128)}', space=vmem, size = 0x1000, scoped, tag = 'scratch operand']
  %s0 = inlined_call_operand.hbm [shape: bf16[2,8,256], index: 0, kind: input, shape index: {}]
  %s1 = inlined_call_operand.hbm [shape: bf16[256,128], index: 1, kind: input, shape index: {}]
  %s2 = inlined_call_operand.vmem [shape: f32[1,128], index: 2, kind: input, shape index: {}]
  %s3 = inlined_call_operand.hbm [shape: bf16[2,8,128], index: 3, kind: input, shape index: {}]
  %s4 = inlined_call_operand.hbm [shape: f32[2,8,128], index: 4, kind: output, shape index: {0}]
  %s5 = inlined_call_operand.hbm [shape: f32[2,1,128], index: 5, kind: output, shape index: {1}]
  %6 = xla_tuple %s4, %s5
  %s7 = sld [smem:[#allocation0]]
  $region77: #{tpu_custom_call.1} parent=0
    _
  %s9 = ssub.s32 1, %s7
  %s10 = scalar_select 0, %s9, %s7
  $region1: #{tpu_custom_call.1} parent=0
    #allocation3 [shape = 'u8[8192]{0}', space=vmem, size = 0x2000, scoped, tag = 'input window, operand 0']
    #allocation4 [shape = 's32[2]{0}', space=sflag, size = 0x8, scoped, tag = 'scoped memory for tpu_custom_call.1']
    #allocation5 [shape = 's32[2]{0}', space=sflag, size = 0x8, scoped, tag = 'scoped memory for tpu_custom_call.1']
    #allocation6 [shape = 'u8[65536]{0}', space=vmem, size = 0x10000, scoped, tag = 'input window, operand 1, single buffered']
    #allocation7 [shape = 's32[1]{0}', space=sflag, size = 0x4, scoped, tag = 'scoped memory for tpu_custom_call.1']
    #allocation8 [shape = 'u8[4096]{0}', space=vmem, size = 0x1000, scoped, tag = 'input window, operand 3']
    #allocation9 [shape = 'u8[8192]{0}', space=vmem, size = 0x2000, scoped, tag = 'output window, operand 0']
    #allocation10 [shape = 'u8[1024]{0}', space=vmem, size = 0x400, scoped, tag = 'output window, operand 1']
    #allocation11 [shape = 's32[2]{0}', space=sflag, size = 0x8, scoped, tag = 'scoped memory for tpu_custom_call.1']
    %11 = vsyncpa [#allocation4], 0
    %s12 = scalar_lea.sflag [#allocation4], 1
    %13 = vsyncpa %s12, 0
    %14 = vsyncpa [#allocation7], 0
    %15 = vsyncpa [#allocation5], 0
    %s16 = scalar_lea.sflag [#allocation5], 1
    %17 = vsyncpa %s16, 0
    %18 = vsyncpa [#allocation11], 0
    %s19 = scalar_lea.sflag [#allocation11], 1
    %20 = vsyncpa %s19, 0
    loop: start=0, step=1, limit=4
    $region2: #{tpu_custom_call.1} parent=1 // loop_pre_header
      _
    $region3: #{tpu_custom_call.1} parent=1 // loop_header
      %s22 = sphi 0, %s26
      %p23 = scmp.ge.s32.totalorder %s22, 4
      %s29 = sphi 0, %s48
      %s30 = sphi 0, %s44
      %s31 = sphi 0, %s40
      %s32 = sphi 0, %s29
      %s33 = sphi 0, %s30
      %s34 = sphi 0, %s31
      %s35 = sphi 0, %s32
      %s36 = sphi 0, %s33
      %s37 = sphi 0, %s34
      %s53 = sphi 0, %s55
      %s56 = sphi 0, %s53
      %s57 = sphi 0, %s56
      %s73 = sphi 0, %s57
      %s81 = sphi 0, %s83
      %s84 = sphi 0, %s81
      %s85 = sphi 0, %s84
      %s101 = sphi 0, %s85
      %s107 = sphi 0, %s109
      %s110 = sphi 0, %s107
      %s111 = sphi 0, %s110
      %s127 = sphi 0, %s111
      %s135 = sphi 0, %s137
      %s138 = sphi 0, %s135
      %s139 = sphi 0, %s138
      %s155 = sphi 0, %s139
      %s163 = sphi 0, %s165
      %s166 = sphi 0, %s163
      %s167 = sphi 0, %s166
      %s183 = sphi 0, %s167
      %s191 = sphi 0, %s193
      %s194 = sphi 0, %s191
      %s195 = sphi 0, %s194
      %s211 = sphi 0, %s195
    $region4: #{tpu_custom_call.1} parent=1 // loop_header_branch
      %25 = sbr.rel (%p23) target = $region8
    $region5: #{tpu_custom_call.1} parent=1 // loop_body
      %s27 = ssub.s32 %s22, 1
      %s28 = ssub.s32 %s22, 2
      %s38 = sadd.s32 1, %s31
      %p39 = scmp.ge.s32.totalorder %s38, 1
      %s40 = scalar_select %p39, 0, %s38
      %s41 = sadd.s32 1, %s30
      %s42 = scalar_select %p39, %s41, %s30
      %p43 = scmp.ge.s32.totalorder %s42, 1
      %s44 = scalar_select %p43, 0, %s42
      %s45 = sadd.s32 1, %s29
      %s46 = scalar_select %p43, %s45, %s29
      %p47 = scmp.ge.s32.totalorder %s46, 2
      %s48 = scalar_select %p47, 0, %s46
      %s49 = ssub.s32 %s29, %s48
      %s50 = ssub.s32 %s31, %s40
      %s51 = sor.u32 %s49, %s50
      %p52 = scmp.eq.s32.totalorder %s51, 0
      %s54 = sadd.s32 %s53, 1
      %s55 = scalar_select %p52, %s53, %s54
      %p58 = pneg %p52
      %p59 = scmp.eq.s32.totalorder %s22, 1
      %p60 = por %p58, %p59
      %p61 = scmp.ne.s32.totalorder %s53, %s56
      %p62 = scmp.eq.s32.totalorder %s22, 0
      %p63 = por %p61, %p62
      %p64 = scmp.ne.s32.totalorder %s53, %s56
      %p65 = scmp.eq.s32.totalorder %s27, 1
      %p66 = por %p64, %p65
      %p67 = scmp.ne.s32.totalorder %s56, %s57
      %p68 = scmp.eq.s32.totalorder %s27, 0
      %p69 = por %p67, %p68
      %p70 = scmp.ne.s32.totalorder %s56, %s57
      %p71 = scmp.eq.s32.totalorder %s28, 1
      %p72 = por %p70, %p71
      %p74 = scmp.ne.s32.totalorder %s57, %s73
      %p75 = scmp.eq.s32.totalorder %s28, 0
      %p76 = por %p74, %p75
      %s77 = ssub.s32 %s31, %s40
      %s78 = ssub.s32 %s30, %s44
      %s79 = sor.u32 %s77, %s78
      %p80 = scmp.eq.s32.totalorder %s79, 0
      %s82 = sadd.s32 %s81, 1
      %s83 = scalar_select %p80, %s81, %s82
      %p86 = pneg %p80
      %p87 = scmp.eq.s32.totalorder %s22, 1
      %p88 = por %p86, %p87
      %p89 = scmp.ne.s32.totalorder %s81, %s84
      %p90 = scmp.eq.s32.totalorder %s22, 0
      %p91 = por %p89, %p90
      %p92 = scmp.ne.s32.totalorder %s81, %s84
      %p93 = scmp.eq.s32.totalorder %s27, 1
      %p94 = por %p92, %p93
      %p95 = scmp.ne.s32.totalorder %s84, %s85
      %p96 = scmp.eq.s32.totalorder %s27, 0
      %p97 = por %p95, %p96
      %p98 = scmp.ne.s32.totalorder %s84, %s85
      %p99 = scmp.eq.s32.totalorder %s28, 1
      %p100 = por %p98, %p99
      %p102 = scmp.ne.s32.totalorder %s85, %s101
      %p103 = scmp.eq.s32.totalorder %s28, 0
      %p104 = por %p102, %p103
      %s105 = ssub.s32 %s30, %s44
      %p106 = scmp.eq.s32.totalorder %s105, 0
      %s108 = sadd.s32 %s107, 1
      %s109 = scalar_select %p106, %s107, %s108
      %p112 = pneg %p106
      %p113 = scmp.eq.s32.totalorder %s22, 1
      %p114 = por %p112, %p113
      %p115 = scmp.ne.s32.totalorder %s107, %s110
      %p116 = scmp.eq.s32.totalorder %s22, 0
      %p117 = por %p115, %p116
      %p118 = scmp.ne.s32.totalorder %s107, %s110
      %p119 = scmp.eq.s32.totalorder %s27, 1
      %p120 = por %p118, %p119
      %p121 = scmp.ne.s32.totalorder %s110, %s111
      %p122 = scmp.eq.s32.totalorder %s27, 0
      %p123 = por %p121, %p122
      %p124 = scmp.ne.s32.totalorder %s110, %s111
      %p125 = scmp.eq.s32.totalorder %s28, 1
      %p126 = por %p124, %p125
      %p128 = scmp.ne.s32.totalorder %s111, %s127
      %p129 = scmp.eq.s32.totalorder %s28, 0
      %p130 = por %p128, %p129
      %s131 = ssub.s32 %s29, %s48
      %s132 = ssub.s32 %s30, %s44
      %s133 = sor.u32 %s131, %s132
      %p134 = scmp.eq.s32.totalorder %s133, 0
      %s136 = sadd.s32 %s135, 1
      %s137 = scalar_select %p134, %s135, %s136
      %p140 = pneg %p134
      %p141 = scmp.eq.s32.totalorder %s22, 1
      %p142 = por %p140, %p141
      %p143 = scmp.ne.s32.totalorder %s135, %s138
      %p144 = scmp.eq.s32.totalorder %s22, 0
      %p145 = por %p143, %p144
      %p146 = scmp.ne.s32.totalorder %s135, %s138
      %p147 = scmp.eq.s32.totalorder %s27, 1
      %p148 = por %p146, %p147
      %p149 = scmp.ne.s32.totalorder %s138, %s139
      %p150 = scmp.eq.s32.totalorder %s27, 0
      %p151 = por %p149, %p150
      %p152 = scmp.ne.s32.totalorder %s138, %s139
      %p153 = scmp.eq.s32.totalorder %s28, 1
      %p154 = por %p152, %p153
      %p156 = scmp.ne.s32.totalorder %s139, %s155
      %p157 = scmp.eq.s32.totalorder %s28, 0
      %p158 = por %p156, %p157
      %s159 = ssub.s32 %s29, %s48
      %s160 = ssub.s32 %s30, %s44
      %s161 = sor.u32 %s159, %s160
      %p162 = scmp.eq.s32.totalorder %s161, 0
      %s164 = sadd.s32 %s163, 1
      %s165 = scalar_select %p162, %s163, %s164
      %p168 = pneg %p162
      %p169 = scmp.eq.s32.totalorder %s22, 1
      %p170 = por %p168, %p169
      %p171 = scmp.ne.s32.totalorder %s163, %s166
      %p172 = scmp.eq.s32.totalorder %s22, 0
      %p173 = por %p171, %p172
      %p174 = scmp.ne.s32.totalorder %s163, %s166
      %p175 = scmp.eq.s32.totalorder %s27, 1
      %p176 = por %p174, %p175
      %p177 = scmp.ne.s32.totalorder %s166, %s167
      %p178 = scmp.eq.s32.totalorder %s27, 0
      %p179 = por %p177, %p178
      %p180 = scmp.ne.s32.totalorder %s166, %s167
      %p181 = scmp.eq.s32.totalorder %s28, 1
      %p182 = por %p180, %p181
      %p184 = scmp.ne.s32.totalorder %s167, %s183
      %p185 = scmp.eq.s32.totalorder %s28, 0
      %p186 = por %p184, %p185
      %s187 = ssub.s32 %s29, %s48
      %s188 = ssub.s32 %s30, %s44
      %s189 = sor.u32 %s187, %s188
      %p190 = scmp.eq.s32.totalorder %s189, 0
      %s192 = sadd.s32 %s191, 1
      %s193 = scalar_select %p190, %s191, %s192
      %p196 = pneg %p190
      %p197 = scmp.eq.s32.totalorder %s22, 1
      %p198 = por %p196, %p197
      %p199 = scmp.ne.s32.totalorder %s191, %s194
      %p200 = scmp.eq.s32.totalorder %s22, 0
      %p201 = por %p199, %p200
      %p202 = scmp.ne.s32.totalorder %s191, %s194
      %p203 = scmp.eq.s32.totalorder %s27, 1
      %p204 = por %p202, %p203
      %p205 = scmp.ne.s32.totalorder %s194, %s195
      %p206 = scmp.eq.s32.totalorder %s27, 0
      %p207 = por %p205, %p206
      %p208 = scmp.ne.s32.totalorder %s194, %s195
      %p209 = scmp.eq.s32.totalorder %s28, 1
      %p210 = por %p208, %p209
      %p212 = scmp.ne.s32.totalorder %s195, %s211
      %p213 = scmp.eq.s32.totalorder %s28, 0
      %p214 = por %p212, %p213
      %p215 = scmp.le.s32.totalorder 1, %s22
      %p216 = scmp.lt.s32.totalorder %s22, 3
      %p217 = pnand %p215, %p216
      %p218 = pneg %p217
      // Predicated region
      $region9: #{tpu_custom_call.1} parent=5 // pred_check
        _
      $region10: #{tpu_custom_call.1} parent=5 // pred_check_branch
        %220 = sbr.rel (%p217) target = $region12
      $region11: #{tpu_custom_call.1} parent=5 // pred_region
        %s221 = ssub.s32 %s22, 1
        // Predicated region
        $region13: #{tpu_custom_call.1} parent=11 // pred_check
          %p222 = pneg %p97
        $region14: #{tpu_custom_call.1} parent=11 // pred_check_branch
          %224 = sbr.rel (%p222) target = $region16
        $region15: #{tpu_custom_call.1} parent=11 // pred_region
          %s225 = smul.u32 32, %s34
          %s227 = ssub.s32 2048, 2048
          %228 = vsyncadd [#allocation7], %s227
          %s229 = sadd.s32 %s33, %s225
          %s230 = smul.addr %s229, 64
          %s231 = scalar_lea.hbm %s1, %s230
          %s232 = sshll.u32 [#allocation6], 4
          %s233 = int_to_ptr.vmem [resolvable:$true] %s232
          %238 = dma.hbm_to_vmem [thread:$0]  %s231, 2048, %s233, [#allocation7], 64, 64, 4
        $region16: #{tpu_custom_call.1} parent=11 // pred_fallthru
          _
        // Predicated region
        $region17: #{tpu_custom_call.1} parent=11 // pred_check
          %p239 = pneg %p123
        $region18: #{tpu_custom_call.1} parent=11 // pred_check_branch
          %241 = sbr.rel (%p239) target = $region20
        $region19: #{tpu_custom_call.1} parent=11 // pred_region
          %p242 = scmp.lt.s32.totalorder %s33, 0
          %s243 = scalar_select %p242, %s33, 0
          %s244 = scalar_lea.vmem %s2, %s243
        $region20: #{tpu_custom_call.1} parent=11 // pred_fallthru
          _
      $region12: #{tpu_custom_call.1} parent=5 // pred_fallthru
        _
      %p245 = scmp.lt.s32.totalorder %s22, 2
      // Predicated region
      $region21: #{tpu_custom_call.1} parent=5 // pred_check
        %p246 = pneg %p245
      $region22: #{tpu_custom_call.1} parent=5 // pred_check_branch
        %248 = sbr.rel (%p246) target = $region24
      $region23: #{tpu_custom_call.1} parent=5 // pred_region
        // Predicated region
        $region25: #{tpu_custom_call.1} parent=23 // pred_check
          %p249 = pneg %p63
        $region26: #{tpu_custom_call.1} parent=23 // pred_check_branch
          %251 = sbr.rel (%p249) target = $region28
        $region27: #{tpu_custom_call.1} parent=23 // pred_region
          %s252 = sand.u32 %s22, 1
          %s253 = scalar_lea.sflag [#allocation4], %s252
          %s254 = sand.u32 %s53, 1
          %s255 = smul.addr %s254, 8
          %s256 = scalar_lea.vmem [#allocation3], %s255
          %s257 = smul.u32 2, %s31
          %s259 = ssub.s32 128, 128
          %260 = vsyncadd %s253, %s259
          %s261 = smul.addr %s29, 2
          %s262 = sadd.s32 %s257, %s261
          %s263 = smul.addr %s262, 64
          %s264 = scalar_lea.hbm %s0, %s263
          %s266 = sshll.u32 %s256, 4
          %s267 = int_to_ptr.vmem [resolvable:$true] %s266
          %269 = dma.hbm_to_vmem [thread:$0]  %s264, 128, %s267, %s253
        $region28: #{tpu_custom_call.1} parent=23 // pred_fallthru
          _
        // Predicated region
        $region29: #{tpu_custom_call.1} parent=23 // pred_check
          %p270 = pneg %p145
        $region30: #{tpu_custom_call.1} parent=23 // pred_check_branch
          %272 = sbr.rel (%p270) target = $region32
        $region31: #{tpu_custom_call.1} parent=23 // pred_region
          %s273 = sand.u32 %s22, 1
          %s274 = scalar_lea.sflag [#allocation4], %s273
          %s275 = sand.u32 %s135, 1
          %s276 = smul.addr %s275, 4
          %s277 = scalar_lea.vmem [#allocation8], %s276
          %s279 = ssub.s32 64, 64
          %280 = vsyncadd %s274, %s279
          %s281 = sadd.s32 %s30, %s29
          %s282 = smul.addr %s281, 64
          %s283 = scalar_lea.hbm %s3, %s282
          %s285 = sshll.u32 %s277, 4
          %s286 = int_to_ptr.vmem [resolvable:$true] %s285
          %288 = dma.hbm_to_vmem [thread:$0]  %s283, 64, %s286, %s274
        $region32: #{tpu_custom_call.1} parent=23 // pred_fallthru
          _
      $region24: #{tpu_custom_call.1} parent=5 // pred_fallthru
        _
      %p289 = scmp.le.s32.totalorder 1, %s22
      %p290 = scmp.lt.s32.totalorder %s22, 3
      %p291 = pnand %p289, %p290
      %p292 = pneg %p291
      // Predicated region
      $region33: #{tpu_custom_call.1} parent=5 // pred_check
        _
      $region34: #{tpu_custom_call.1} parent=5 // pred_check_branch
        %294 = sbr.rel (%p291) target = $region36
      $region35: #{tpu_custom_call.1} parent=5 // pred_region
        %s295 = ssub.s32 %s22, 1
        %s296 = sand.u32 %s27, 1
        %s297 = scalar_lea.sflag [#allocation4], %s296
        %s298 = sand.u32 %s56, 1
        %s299 = smul.addr %s298, 8
        %s300 = scalar_lea.vmem [#allocation3], %s299
        // Predicated region
        $region37: #{tpu_custom_call.1} parent=35 // pred_check
          %p301 = pneg %p69
        $region38: #{tpu_custom_call.1} parent=35 // pred_check_branch
          %303 = sbr.rel (%p301) target = $region40
        $region39: #{tpu_custom_call.1} parent=35 // pred_region
          %304 = dma.done %s297, 128
        $region40: #{tpu_custom_call.1} parent=35 // pred_fallthru
          _
        // Predicated region
        $region41: #{tpu_custom_call.1} parent=35 // pred_check
          %p305 = pneg %p97
        $region42: #{tpu_custom_call.1} parent=35 // pred_check_branch
          %307 = sbr.rel (%p305) target = $region44
        $region43: #{tpu_custom_call.1} parent=35 // pred_region
          %308 = dma.done [#allocation7], 2048
        $region44: #{tpu_custom_call.1} parent=35 // pred_fallthru
          _
        %s309 = sand.u32 %s27, 1
        %s310 = scalar_lea.sflag [#allocation4], %s309
        %s311 = sand.u32 %s138, 1
        %s312 = smul.addr %s311, 4
        %s313 = scalar_lea.vmem [#allocation8], %s312
        // Predicated region
        $region45: #{tpu_custom_call.1} parent=35 // pred_check
          %p314 = pneg %p151
        $region46: #{tpu_custom_call.1} parent=35 // pred_check_branch
          %316 = sbr.rel (%p314) target = $region48
        $region47: #{tpu_custom_call.1} parent=35 // pred_region
          %317 = dma.done %s310, 64
        $region48: #{tpu_custom_call.1} parent=35 // pred_fallthru
          _
        %s318 = sand.u32 %s27, 1
        %s319 = scalar_lea.sflag [#allocation4], %s318
        %s320 = sand.u32 %s56, 1
        %s321 = smul.addr %s320, 8
        %s322 = scalar_lea.vmem [#allocation3], %s321
        %p323 = pneg %p69
        %p324 = pneg %p66
        %p325 = pneg %p97
        %p326 = pneg %p94
        %p327 = scmp.lt.s32.totalorder %s33, 0
        %s328 = scalar_select %p327, %s33, 0
        %s329 = scalar_lea.vmem %s2, %s328
        %p330 = pneg %p123
        %p331 = pneg %p120
        %s332 = sand.u32 %s27, 1
        %s333 = scalar_lea.sflag [#allocation4], %s332
        %s334 = sand.u32 %s138, 1
        %s335 = smul.addr %s334, 4
        %s336 = scalar_lea.vmem [#allocation8], %s335
        %p337 = pneg %p151
        %p338 = pneg %p148
        %p339 = pneg %p179
        %p340 = pneg %p176
        %s341 = sand.u32 %s166, 1
        %s342 = scalar_lea.sflag [#allocation5], %s341
        %s343 = sand.u32 %s166, 1
        %s344 = smul.addr %s343, 8
        %s345 = scalar_lea.vmem [#allocation9], %s344
        %p346 = pneg %p207
        %p347 = pneg %p204
        %s348 = sand.u32 %s194, 1
        %s349 = scalar_lea.sflag [#allocation11], %s348
        %s350 = sand.u32 %s194, 1
        %s351 = scalar_lea.vmem [#allocation10], %s350
        %s352 = smul.u32 2, %s34
        %s353 = smul.u32 32, %s34
        %p354 = scmp.lt.s32.totalorder %s33, 0
        %s355 = scalar_select %p354, %s33, 0
        %s356 = scalar_lea.vmem %s2, %s355
        %p358 = scmp.eq.s32.totalorder %s34, 0
        // Predicated region
        $region49: #{tpu_custom_call.1} parent=35 // pred_check
          %p359 = pneg %p358
        $region50: #{tpu_custom_call.1} parent=35 // pred_check_branch
          %361 = sbr.rel (%p359) target = $region52
        $region51: #{tpu_custom_call.1} parent=35 // pred_region
          %362 = vst [vmem:[#allocation2] sm:$0xff] 0.0
        $region52: #{tpu_custom_call.1} parent=35 // pred_fallthru
          _
        %v363 = vld [vmem:[#allocation2] sm:$0xff]
        %v364 = vld [vmem:[%s300] sm:$0xff]
        %v365 = vld [vmem:[#allocation6] sm:$0xf]
        %v366 = vld [vmem:[#allocation6 + $0x4] sm:$0xf]
        %v367 = vld [vmem:[#allocation6 + $0x8] sm:$0xf]
        %v368 = vld [vmem:[#allocation6 + $0xc] sm:$0xf]
        %v369 = vld [vmem:[#allocation6 + $0x10] sm:$0xf]
        %v370 = vld [vmem:[#allocation6 + $0x14] sm:$0xf]
        %v371 = vld [vmem:[#allocation6 + $0x18] sm:$0xf]
        %v372 = vld [vmem:[#allocation6 + $0x1c] sm:$0xf]
        %v373 = vld [vmem:[#allocation6 + $0x20] sm:$0xf]
        %v374 = vld [vmem:[#allocation6 + $0x24] sm:$0xf]
        %v375 = vld [vmem:[#allocation6 + $0x28] sm:$0xf]
        %v376 = vld [vmem:[#allocation6 + $0x2c] sm:$0xf]
        %v377 = vld [vmem:[#allocation6 + $0x30] sm:$0xf]
        %v378 = vld [vmem:[#allocation6 + $0x34] sm:$0xf]
        %v379 = vld [vmem:[#allocation6 + $0x38] sm:$0xf]
        %v380 = vld [vmem:[#allocation6 + $0x3c] sm:$0xf]
        %v381 = vld [vmem:[#allocation6 + $0x40] sm:$0xf]
        %v382 = vld [vmem:[#allocation6 + $0x44] sm:$0xf]
        %v383 = vld [vmem:[#allocation6 + $0x48] sm:$0xf]
        %v384 = vld [vmem:[#allocation6 + $0x4c] sm:$0xf]
        %v385 = vld [vmem:[#allocation6 + $0x50] sm:$0xf]
        %v386 = vld [vmem:[#allocation6 + $0x54] sm:$0xf]
        %v387 = vld [vmem:[#allocation6 + $0x58] sm:$0xf]
        %v388 = vld [vmem:[#allocation6 + $0x5c] sm:$0xf]
        %v389 = vld [vmem:[#allocation6 + $0x60] sm:$0xf]
        %v390 = vld [vmem:[#allocation6 + $0x64] sm:$0xf]
        %v391 = vld [vmem:[#allocation6 + $0x68] sm:$0xf]
        %v392 = vld [vmem:[#allocation6 + $0x6c] sm:$0xf]
        %v393 = vld [vmem:[#allocation6 + $0x70] sm:$0xf]
        %v394 = vld [vmem:[#allocation6 + $0x74] sm:$0xf]
        %v395 = vld [vmem:[#allocation6 + $0x78] sm:$0xf]
        %v396 = vld [vmem:[#allocation6 + $0x7c] sm:$0xf]
        %v398 = vunpack.c.l.b16 %v364
        %v399 = vunpack.c.h.b16 %v364
        %v400 = vpack.c.b16 %v398, %v398
        %v401 = vpack.c.b16 %v399, %v399
        %v436 = vunpack.c.l.b16 %v365
        %v437 = vunpack.c.l.b16 %v366
        %v438 = vunpack.c.l.b16 %v367
        %v439 = vunpack.c.l.b16 %v368
        %v440 = vunpack.c.l.b16 %v369
        %v441 = vunpack.c.l.b16 %v370
        %v442 = vunpack.c.l.b16 %v371
        %v443 = vunpack.c.l.b16 %v372
        %v444 = vunpack.c.l.b16 %v373
        %v445 = vunpack.c.l.b16 %v374
        %v446 = vunpack.c.l.b16 %v375
        %v447 = vunpack.c.l.b16 %v376
        %v448 = vunpack.c.l.b16 %v377
        %v449 = vunpack.c.l.b16 %v378
        %v450 = vunpack.c.l.b16 %v379
        %v451 = vunpack.c.l.b16 %v380
        %v452 = vunpack.c.l.b16 %v381
        %v453 = vunpack.c.l.b16 %v382
        %v454 = vunpack.c.l.b16 %v383
        %v455 = vunpack.c.l.b16 %v384
        %v456 = vunpack.c.l.b16 %v385
        %v457 = vunpack.c.l.b16 %v386
        %v458 = vunpack.c.l.b16 %v387
        %v459 = vunpack.c.l.b16 %v388
        %v460 = vunpack.c.l.b16 %v389
        %v461 = vunpack.c.l.b16 %v390
        %v462 = vunpack.c.l.b16 %v391
        %v463 = vunpack.c.l.b16 %v392
        %v464 = vunpack.c.l.b16 %v393
        %v465 = vunpack.c.l.b16 %v394
        %v466 = vunpack.c.l.b16 %v395
        %v467 = vunpack.c.l.b16 %v396
        %v468 = vpack.c.b16 %v437, %v436
        %v469 = vpack.c.b16 %v439, %v438
        %v470 = vpack.c.b16 %v441, %v440
        %v471 = vpack.c.b16 %v443, %v442
        %v472 = vpack.c.b16 %v445, %v444
        %v473 = vpack.c.b16 %v447, %v446
        %v474 = vpack.c.b16 %v449, %v448
        %v475 = vpack.c.b16 %v451, %v450
        %v476 = vpack.c.b16 %v453, %v452
        %v477 = vpack.c.b16 %v455, %v454
        %v478 = vpack.c.b16 %v457, %v456
        %v479 = vpack.c.b16 %v459, %v458
        %v480 = vpack.c.b16 %v461, %v460
        %v481 = vpack.c.b16 %v463, %v462
        %v482 = vpack.c.b16 %v465, %v464
        %v483 = vpack.c.b16 %v467, %v466
        %500 = vmatprep.subr.bf16.mxu0 0
        %501 = vmatpush1.bf16.msra.mxu0 %v475
        %502 = vmatprep.subr.bf16.mxu0 0
        %503 = vmatpush1.bf16.msra.mxu0 %v474
        %504 = vmatprep.subr.bf16.mxu0 0
        %505 = vmatpush1.bf16.msra.mxu0 %v473
        %506 = vmatprep.subr.bf16.mxu0 0
        %507 = vmatpush1.bf16.msra.mxu0 %v472
        %508 = vmatprep.subr.bf16.mxu0 0
        %509 = vmatpush1.bf16.msra.mxu0 %v471
        %510 = vmatprep.subr.bf16.mxu0 0
        %511 = vmatpush1.bf16.msra.mxu0 %v470
        %512 = vmatprep.subr.bf16.mxu0 0
        %513 = vmatpush1.bf16.msra.mxu0 %v469
        %514 = vmatprep.subr.bf16.mxu0 0
        %515 = vmatpush1.bf16.msra.mxu0 %v468
        %516 = vmatprep.subr.bf16.mxu0 0
        %517 = vmatpush2.bf16.msra.mxu0 %v483
        %518 = vmatprep.subr.bf16.mxu0 0
        %519 = vmatpush2.bf16.msra.mxu0 %v482
        %520 = vmatprep.subr.bf16.mxu0 0
        %521 = vmatpush2.bf16.msra.mxu0 %v481
        %522 = vmatprep.subr.bf16.mxu0 0
        %523 = vmatpush2.bf16.msra.mxu0 %v480
        %524 = vmatprep.subr.bf16.mxu0 0
        %525 = vmatpush2.bf16.msra.mxu0 %v479
        %526 = vmatprep.subr.bf16.mxu0 0
        %527 = vmatpush2.bf16.msra.mxu0 %v478
        %528 = vmatprep.subr.bf16.mxu0 0
        %529 = vmatpush2.bf16.msra.mxu0 %v477
        %530 = vmatprep.subr.bf16.mxu0 0
        %531 = vmatpush2.bf16.msra.mxu0 %v476
        %532 = vmatprep.mubr.bf16.mxu0 %v401
        %533 = vmatmul.mubr.bf16.gmra.mxu0 %v400
        %v534 = vpop.f32.mrf.mxu0
        %v535 = vadd.f32 0.0, %v534
        %v536 = vpop.f32.mrf.mxu0
        %v537 = vpop.f32.mrf.mxu0
        %v538 = vpop.f32.mrf.mxu0
        %539 = vdwg.mxu0
        %v540 = vadd.f32 %v363, %v535
        %541 = vst [vmem:[#allocation2] sm:$0xff] %v540
        // Predicated region
        $region53: #{tpu_custom_call.1} parent=35 // pred_check
          %p542 = pneg %p358
        $region54: #{tpu_custom_call.1} parent=35 // pred_check_branch
          %544 = sbr.rel (%p542) target = $region56
        $region55: #{tpu_custom_call.1} parent=35 // pred_region
          %v545 = vld [vmem:[#allocation2] sm:$0xff]
          %v546 = vld [vmem:[%s356] sm:$0x1]
          %v548 = vlaneseq
          %v549 = vshrl.u32 %v548, 7
          %v550 = vsub.s32 0, %v549
          %v551 = vrot.slane %v546, %v550
          %v553 = vadd.f32 %v545, %v551
          %554 = vst [vmem:[%s345] sm:$0xff] %v553
          %v555 = vld [vmem:[%s313] sm:$0xf]
          %v556 = vunpack.c.l.bf16 %v555
          %v557 = vmul.f32 %v553, %v556
          %v558 = vrot.slane %v557, 4
          %v559 = vadd.f32 %v557, %v558
          %v560 = vrot.slane %v559, 2
          %v561 = vadd.f32 %v559, %v560
          %v562 = vrot.slane %v561, 1
          %v563 = vadd.f32 %v561, %v562
          %v564 = vmul.f32 %v553, %v553
          %v565 = vrot.slane %v564, 4
          %v566 = vadd.f32 %v564, %v565
          %v567 = vrot.slane %v566, 2
          %v568 = vadd.f32 %v566, %v567
          %v569 = vrot.slane %v568, 1
          %v570 = vadd.f32 %v568, %v569
          %v571 = vmul.f32 %v556, %v556
          %v572 = vrot.slane %v571, 4
          %v573 = vadd.f32 %v571, %v572
          %v574 = vrot.slane %v573, 2
          %v575 = vadd.f32 %v573, %v574
          %v576 = vrot.slane %v575, 1
          %v577 = vadd.f32 %v575, %v576
          %v578 = vmul.f32 %v570, %v577
          %v579 = vmax.f32 %v578, 1e-16
          %v580 = vrsqrt.pop %v579
          %v581 = vmul.f32 %v563, %v580
          %582 = vst [vmem:[%s351] sm:$0x1] %v581
        $region56: #{tpu_custom_call.1} parent=35 // pred_fallthru
          _
        %s583 = sand.u32 %s166, 1
        %s584 = scalar_lea.sflag [#allocation5], %s583
        %s585 = sand.u32 %s166, 1
        %s586 = smul.addr %s585, 8
        %s587 = scalar_lea.vmem [#allocation9], %s586
        %s588 = sand.u32 %s194, 1
        %s589 = scalar_lea.sflag [#allocation11], %s588
        %s590 = sand.u32 %s194, 1
        %s591 = scalar_lea.vmem [#allocation10], %s590
        // Predicated region
        $region57: #{tpu_custom_call.1} parent=35 // pred_check
          %p592 = pneg %p176
        $region58: #{tpu_custom_call.1} parent=35 // pred_check_branch
          %594 = sbr.rel (%p592) target = $region60
        $region59: #{tpu_custom_call.1} parent=35 // pred_region
          %s596 = ssub.s32 128, 128
          %597 = vsyncadd %s584, %s596
          %s598 = sadd.s32 %s33, %s32
          %s599 = smul.addr %s598, 128
          %s600 = scalar_lea.hbm %s4, %s599
          %s602 = sshll.u32 %s587, 4
          %s603 = int_to_ptr.vmem [resolvable:$true] %s602
          %605 = dma.vmem_to_hbm [thread:$0]  %s603, 128, %s600, %s584
        $region60: #{tpu_custom_call.1} parent=35 // pred_fallthru
          _
        // Predicated region
        $region61: #{tpu_custom_call.1} parent=35 // pred_check
          %p606 = pneg %p204
        $region62: #{tpu_custom_call.1} parent=35 // pred_check_branch
          %608 = sbr.rel (%p606) target = $region64
        $region63: #{tpu_custom_call.1} parent=35 // pred_region
          %s610 = ssub.s32 16, 16
          %611 = vsyncadd %s589, %s610
          %s612 = sadd.s32 %s33, %s32
          %s613 = smul.addr %s612, 16
          %s614 = scalar_lea.hbm %s5, %s613
          %s616 = sshll.u32 %s591, 4
          %s617 = int_to_ptr.vmem [resolvable:$true] %s616
          %619 = dma.vmem_to_hbm [thread:$0]  %s617, 16, %s614, %s589
        $region64: #{tpu_custom_call.1} parent=35 // pred_fallthru
          _
      $region36: #{tpu_custom_call.1} parent=5 // pred_fallthru
        _
      %p620 = scmp.le.s32.totalorder 2, %s22
      // Predicated region
      $region65: #{tpu_custom_call.1} parent=5 // pred_check
        %p621 = pneg %p620
      $region66: #{tpu_custom_call.1} parent=5 // pred_check_branch
        %623 = sbr.rel (%p621) target = $region68
      $region67: #{tpu_custom_call.1} parent=5 // pred_region
        %s624 = ssub.s32 %s22, 2
        // Predicated region
        $region69: #{tpu_custom_call.1} parent=67 // pred_check
          %p625 = pneg %p182
        $region70: #{tpu_custom_call.1} parent=67 // pred_check_branch
          %627 = sbr.rel (%p625) target = $region72
        $region71: #{tpu_custom_call.1} parent=67 // pred_region
          %s628 = sand.u32 %s167, 1
          %s629 = scalar_lea.sflag [#allocation5], %s628
          %s630 = sand.u32 %s167, 1
          %s631 = smul.addr %s630, 8
          %s632 = scalar_lea.vmem [#allocation9], %s631
          %633 = dma.done %s629, 128
        $region72: #{tpu_custom_call.1} parent=67 // pred_fallthru
          _
        // Predicated region
        $region73: #{tpu_custom_call.1} parent=67 // pred_check
          %p634 = pneg %p210
        $region74: #{tpu_custom_call.1} parent=67 // pred_check_branch
          %636 = sbr.rel (%p634) target = $region76
        $region75: #{tpu_custom_call.1} parent=67 // pred_region
          %s637 = sand.u32 %s195, 1
          %s638 = scalar_lea.sflag [#allocation11], %s637
          %s639 = sand.u32 %s195, 1
          %s640 = scalar_lea.vmem [#allocation10], %s639
          %641 = dma.done %s638, 16
        $region76: #{tpu_custom_call.1} parent=67 // pred_fallthru
          _
      $region68: #{tpu_custom_call.1} parent=5 // pred_fallthru
        _
    $region6: #{tpu_custom_call.1} parent=1 // loop_footer
      %s26 = sadd.s32 1, %s22
    $region7: #{tpu_custom_call.1} parent=1 // loop_footer_branch
      %21 = sbr.rel target = $region3
    $region8: #{tpu_custom_call.1} parent=1 // loop_exit
      _
    %642 = vsyncpa [#allocation4], 1
    %s643 = scalar_lea.sflag [#allocation4], 1
    %644 = vsyncpa %s643, 1
    %645 = vsyncpa [#allocation7], 1
    %646 = vsyncpa [#allocation5], 1
    %s647 = scalar_lea.sflag [#allocation5], 1
    %648 = vsyncpa %s647, 1
    %649 = vsyncpa [#allocation11], 1
    %s650 = scalar_lea.sflag [#allocation11], 1
    %651 = vsyncpa %s650, 1

</llo_original>
